<compile_context>
chip_gen: v7x
topology: tpu7x:2x2x1
jax: 0.10.0
libtpu: 0.0.40
codegen_flags: <defaults>
</compile_context>

<pallas_src>
import functools

import jax
import jax.numpy as jnp
from jax.experimental import pallas as pl
from jax.experimental.pallas import tpu as pltpu


def _se_kernel(x_ref, w1_ref, b1_ref, w2_ref, b2_ref, o_ref):
    # x_ref block: (Nb, C, HW); weights/biases are full (tiny) arrays.
    xv = x_ref[...]                                    # (Nb, C, HW)
    xf = xv.astype(jnp.float32)

    # --- squeeze: global average pool over the spatial (lane) axis ---
    pooled = jnp.mean(xf, axis=-1)                     # (Nb, C) f32

    # --- excitation (VPU/XLU): broadcast-multiply + lane reduce, batched ---
    # h = pooled @ w1.T + b1 ; relu ; s = h @ w2.T + b2 ; sigmoid
    w1 = w1_ref[...].astype(jnp.float32)               # (Cr, C)
    w2 = w2_ref[...].astype(jnp.float32)               # (C, Cr)
    h = jnp.sum(pooled[:, None, :] * w1[None, :, :], axis=-1) \
        + b1_ref[...].astype(jnp.float32)              # (Nb, Cr)
    h = jnp.maximum(h, 0.0)                            # ReLU
    s = jnp.sum(h[:, None, :] * w2[None, :, :], axis=-1) \
        + b2_ref[...].astype(jnp.float32)              # (Nb, C)
    gate = jax.nn.sigmoid(s)                           # (Nb, C)

    # --- scale: broadcast channel gate over spatial positions (once/step) ---
    o_ref[...] = (xf * gate[:, :, None]).astype(o_ref.dtype)


def _pick_nb(N, C, HW, dtype_bytes, vmem_budget_bytes):
    """Pick batch-elements-per-grid-step so double-buffered in+out fits VMEM,
    while keeping >= 2 grid steps (for v7x's two TensorCores) when N >= 2."""
    per_batch = C * HW * dtype_bytes
    # 2 buffers (pipeline) x (input block + output block) resident.
    nb = max(1, vmem_budget_bytes // (4 * per_batch))
    if N >= 2:
        nb = min(nb, (N + 1) // 2)        # keep at least 2 grid steps
    nb = min(nb, N)
    while N % nb != 0:                    # avoid ragged last block
        nb -= 1
    return nb


def squeeze_and_excitation(x, w1, b1, w2, b2):
    """x: (N, C, H, W). w1: (Cr, C), b1: (Cr,), w2: (C, Cr), b2: (C,)."""
    N, C, H, W = x.shape
    HW = H * W
    Cr = w1.shape[0]

    x_flat = x.reshape(N, C, HW)
    b1_2d = b1.reshape(1, Cr)
    b2_2d = b2.reshape(1, C)

    dtype_bytes = jnp.dtype(x.dtype).itemsize
    # ~40 MiB of the 48 MiB scoped VMEM we request below; weights are tiny.
    nb = _pick_nb(N, C, HW, dtype_bytes, vmem_budget_bytes=40 * 1024 * 1024)
    grid = (N // nb,)

    out_flat = pl.pallas_call(
        _se_kernel,
        out_shape=jax.ShapeDtypeStruct((N, C, HW), x.dtype),
        grid_spec=pltpu.PrefetchScalarGridSpec(
            num_scalar_prefetch=0,
            grid=grid,
            in_specs=[
                pl.BlockSpec((nb, C, HW), lambda n: (n, 0, 0)),  # x tile
                pl.BlockSpec((Cr, C), lambda n: (0, 0)),         # fc1 weight
                pl.BlockSpec((1, Cr), lambda n: (0, 0)),         # fc1 bias
                pl.BlockSpec((C, Cr), lambda n: (0, 0)),         # fc2 weight
                pl.BlockSpec((1, C), lambda n: (0, 0)),          # fc2 bias
            ],
            out_specs=pl.BlockSpec((nb, C, HW), lambda n: (n, 0, 0)),
        ),
        compiler_params=pltpu.CompilerParams(
            dimension_semantics=("parallel",),
            vmem_limit_bytes=48 * 1024 * 1024,
        ),
    )(x_flat, w1, b1_2d, w2, b2_2d)

    return out_flat.reshape(N, C, H, W)


def _reference(x, w1, b1, w2, b2):
    # Pure-JAX reference of the PyTorch forward.
    pooled = jnp.mean(x, axis=(2, 3))                        # (N, C)
    h = jnp.maximum(pooled @ w1.T + b1, 0.0)                 # (N, Cr)
    gate = jax.nn.sigmoid(h @ w2.T + b2)                     # (N, C)
    return x * gate[:, :, None, None]


if __name__ == "__main__":
    # Small shapes consistent with the module: channel=32, reduction=16 -> Cr=2.
    N, C, H, W = 2, 32, 16, 16
    reduction = 16
    Cr = C // reduction

    key = jax.random.PRNGKey(0)
    kx, k1, k2, k3, k4 = jax.random.split(key, 5)
    x = jax.random.normal(kx, (N, C, H, W), dtype=jnp.float32)
    w1 = jax.random.normal(k1, (Cr, C), dtype=jnp.float32) * 0.1   # conv1 1x1 weight
    b1 = jax.random.normal(k2, (Cr,), dtype=jnp.float32) * 0.1
    w2 = jax.random.normal(k3, (C, Cr), dtype=jnp.float32) * 0.1   # conv2 1x1 weight
    b2 = jax.random.normal(k4, (C,), dtype=jnp.float32) * 0.1

    y = squeeze_and_excitation(x, w1, b1, w2, b2)
    jax.block_until_ready(y)

    y_ref = _reference(x, w1, b1, w2, b2)
    assert jnp.allclose(y, y_ref, atol=1e-5, rtol=1e-5), "mismatch vs reference"

    print("KERNEL_OK")
</pallas_src>

<mosaic_0001>
module attributes {stable_mosaic.version = 11 : i64} {
  func.func @_se_kernel(%arg0: i32, %arg1: memref<1x32x256xf32, #tpu.memory_space<vmem>>, %arg2: memref<2x32xf32, #tpu.memory_space<vmem>>, %arg3: memref<1x2xf32, #tpu.memory_space<vmem>>, %arg4: memref<32x2xf32, #tpu.memory_space<vmem>>, %arg5: memref<1x32xf32, #tpu.memory_space<vmem>>, %arg6: memref<1x32x256xf32, #tpu.memory_space<vmem>>) attributes {dimension_semantics = [#tpu.dimension_semantics<parallel>], iteration_bounds = array<i64: 2>, scalar_prefetch = 0 : i64, scratch_operands = 0 : i64, tpu.core_type = #tpu.core_type<tc>, window_params = [{transform_indices = @transform_0, window_bounds = array<i64: 1, 32, 256>}, {pipeline_mode = #tpu.pipeline_mode<synchronous>, transform_indices = @transform_1, window_bounds = array<i64: 2, 32>}, {pipeline_mode = #tpu.pipeline_mode<synchronous>, transform_indices = @transform_2, window_bounds = array<i64: 1, 2>}, {pipeline_mode = #tpu.pipeline_mode<synchronous>, transform_indices = @transform_3, window_bounds = array<i64: 32, 2>}, {pipeline_mode = #tpu.pipeline_mode<synchronous>, transform_indices = @transform_4, window_bounds = array<i64: 1, 32>}, {transform_indices = @transform_5, window_bounds = array<i64: 1, 32, 256>}]} {
    %c0 = arith.constant 0 : index
    %c0_0 = arith.constant 0 : index
    %c0_1 = arith.constant 0 : index
    %0 = vector.load %arg1[%c0, %c0_0, %c0_1] : memref<1x32x256xf32, #tpu.memory_space<vmem>>, vector<1x32x256xf32>
    %cst = arith.constant dense<0.000000e+00> : vector<1x32xf32>
    %1 = vector.multi_reduction <add>, %0, %cst [2] : vector<1x32x256xf32> to vector<1x32xf32>
    %cst_2 = arith.constant 2.560000e+02 : f32
    %2 = vector.broadcast %cst_2 : f32 to vector<1x32xf32>
    %3 = arith.divf %1, %2 : vector<1x32xf32>
    %c0_3 = arith.constant 0 : index
    %c0_4 = arith.constant 0 : index
    %4 = vector.load %arg2[%c0_3, %c0_4] : memref<2x32xf32, #tpu.memory_space<vmem>>, vector<2x32xf32>
    %c0_5 = arith.constant 0 : index
    %c0_6 = arith.constant 0 : index
    %5 = vector.load %arg4[%c0_5, %c0_6] : memref<32x2xf32, #tpu.memory_space<vmem>>, vector<32x2xf32>
    %6 = vector.shape_cast %3 : vector<1x32xf32> to vector<1x1x32xf32>
    %7 = vector.shape_cast %4 : vector<2x32xf32> to vector<1x2x32xf32>
    %8 = vector.broadcast %6 : vector<1x1x32xf32> to vector<1x2x32xf32>
    %9 = arith.mulf %8, %7 : vector<1x2x32xf32>
    %cst_7 = arith.constant dense<0.000000e+00> : vector<1x2xf32>
    %10 = vector.multi_reduction <add>, %9, %cst_7 [2] : vector<1x2x32xf32> to vector<1x2xf32>
    %c0_8 = arith.constant 0 : index
    %c0_9 = arith.constant 0 : index
    %11 = vector.load %arg3[%c0_8, %c0_9] : memref<1x2xf32, #tpu.memory_space<vmem>>, vector<1x2xf32>
    %12 = arith.addf %10, %11 : vector<1x2xf32>
    %cst_10 = arith.constant 0.000000e+00 : f32
    %13 = vector.broadcast %cst_10 : f32 to vector<1x2xf32>
    %14 = arith.maximumf %12, %13 : vector<1x2xf32>
    %15 = vector.shape_cast %14 : vector<1x2xf32> to vector<1x1x2xf32>
    %16 = vector.shape_cast %5 : vector<32x2xf32> to vector<1x32x2xf32>
    %17 = vector.broadcast %15 : vector<1x1x2xf32> to vector<1x32x2xf32>
    %18 = arith.mulf %17, %16 : vector<1x32x2xf32>
    %cst_11 = arith.constant dense<0.000000e+00> : vector<1x32xf32>
    %19 = vector.multi_reduction <add>, %18, %cst_11 [2] : vector<1x32x2xf32> to vector<1x32xf32>
    %c0_12 = arith.constant 0 : index
    %c0_13 = arith.constant 0 : index
    %20 = vector.load %arg5[%c0_12, %c0_13] : memref<1x32xf32, #tpu.memory_space<vmem>>, vector<1x32xf32>
    %21 = arith.addf %19, %20 : vector<1x32xf32>
    %22 = arith.negf %21 : vector<1x32xf32>
    %23 = math.exp %22 : vector<1x32xf32>
    %cst_14 = arith.constant 1.000000e+00 : f32
    %24 = vector.broadcast %cst_14 : f32 to vector<1x32xf32>
    %25 = arith.addf %24, %23 : vector<1x32xf32>
    %26 = arith.divf %24, %25 : vector<1x32xf32>
    %27 = vector.shape_cast %26 : vector<1x32xf32> to vector<1x32x1xf32>
    %28 = vector.broadcast %27 : vector<1x32x1xf32> to vector<1x32x256xf32>
    %29 = arith.mulf %0, %28 : vector<1x32x256xf32>
    %c0_15 = arith.constant 0 : index
    %c0_16 = arith.constant 0 : index
    %c0_17 = arith.constant 0 : index
    %30 = vector.load %arg6[%c0_15, %c0_16, %c0_17] : memref<1x32x256xf32, #tpu.memory_space<vmem>>, vector<1x32x256xf32>
    tpu.vector_store %arg6[%c0_15, %c0_16, %c0_17], %29 {strides = array<i32>} : memref<1x32x256xf32, #tpu.memory_space<vmem>>, vector<1x32x256xf32>,
    return
  }
  func.func @transform_0(%arg0: i32) -> (i32, i32, i32) {
    %c0_i32 = arith.constant 0 : i32
    %c0_i32_0 = arith.constant 0 : i32
    %c0_i32_1 = arith.constant 0 : i32
    return %arg0, %c0_i32, %c0_i32_0 : i32, i32, i32
  }
  func.func @transform_1(%arg0: i32) -> (i32, i32) {
    %c0_i32 = arith.constant 0 : i32
    %c0_i32_0 = arith.constant 0 : i32
    %c0_i32_1 = arith.constant 0 : i32
    return %c0_i32, %c0_i32_0 : i32, i32
  }
  func.func @transform_2(%arg0: i32) -> (i32, i32) {
    %c0_i32 = arith.constant 0 : i32
    %c0_i32_0 = arith.constant 0 : i32
    %c0_i32_1 = arith.constant 0 : i32
    return %c0_i32, %c0_i32_0 : i32, i32
  }
  func.func @transform_3(%arg0: i32) -> (i32, i32) {
    %c0_i32 = arith.constant 0 : i32
    %c0_i32_0 = arith.constant 0 : i32
    %c0_i32_1 = arith.constant 0 : i32
    return %c0_i32, %c0_i32_0 : i32, i32
  }
  func.func @transform_4(%arg0: i32) -> (i32, i32) {
    %c0_i32 = arith.constant 0 : i32
    %c0_i32_0 = arith.constant 0 : i32
    %c0_i32_1 = arith.constant 0 : i32
    return %c0_i32, %c0_i32_0 : i32, i32
  }
  func.func @transform_5(%arg0: i32) -> (i32, i32, i32) {
    %c0_i32 = arith.constant 0 : i32
    %c0_i32_0 = arith.constant 0 : i32
    %c0_i32_1 = arith.constant 0 : i32
    return %arg0, %c0_i32, %c0_i32_0 : i32, i32, i32
  }
}

</mosaic_0001>

<llo_original>
// kernel: tpu_custom_call.1
$region0: #{tpu_custom_call.1}
  #allocation0 [shape = 'u32[]', space=smem, size = 0x4, offset = 0x4, fixed_abs, tag = 'smem constant byte address 0x4 - core index']
  #allocation1 [shape = 'u32[144,128]{1,0:T(1,128)}', space=vmem, size = 0x12000, scoped, tag = 'internal scratch']
  %s0 = inlined_call_operand.hbm [shape: f32[2,32,256], index: 0, kind: input, shape index: {}]
  %s1 = inlined_call_operand.vmem [shape: f32[2,32], index: 1, kind: input, shape index: {}]
  %s2 = inlined_call_operand.vmem [shape: f32[1,2], index: 2, kind: input, shape index: {}]
  %s3 = inlined_call_operand.vmem [shape: f32[32,2], index: 3, kind: input, shape index: {}]
  %s4 = inlined_call_operand.vmem [shape: f32[1,32], index: 4, kind: input, shape index: {}]
  %s5 = inlined_call_operand.hbm [shape: f32[2,32,256], index: 5, kind: output, shape index: {}]
  %s6 = sld [smem:[#allocation0]]
  $region57: #{tpu_custom_call.1} parent=0
    _
  %s8 = ssub.s32 1, %s6
  %s9 = scalar_select 0, %s8, %s6
  $region1: #{tpu_custom_call.1} parent=0
    #allocation2 [shape = 'u8[65536]{0}', space=vmem, size = 0x10000, scoped, tag = 'input window, operand 0']
    #allocation3 [shape = 's32[2]{0}', space=sflag, size = 0x8, scoped, tag = 'scoped memory for tpu_custom_call.1']
    #allocation4 [shape = 's32[2]{0}', space=sflag, size = 0x8, scoped, tag = 'scoped memory for tpu_custom_call.1']
    #allocation5 [shape = 'u8[65536]{0}', space=vmem, size = 0x10000, scoped, tag = 'output window, operand 0']
    %10 = vsyncpa [#allocation3], 0
    %s11 = scalar_lea.sflag [#allocation3], 1
    %12 = vsyncpa %s11, 0
    %13 = vsyncpa [#allocation4], 0
    %s14 = scalar_lea.sflag [#allocation4], 1
    %15 = vsyncpa %s14, 0
    loop: start=0, step=1, limit=4
    $region2: #{tpu_custom_call.1} parent=1 // loop_pre_header
      _
    $region3: #{tpu_custom_call.1} parent=1 // loop_header
      %s17 = sphi 0, %s21
      %p18 = scmp.ge.s32.totalorder %s17, 4
      %s27 = sphi 0, %s29
      %s30 = sphi 0, %s27
      %s31 = sphi 0, %s30
      %s47 = sphi 0, %s31
      %s51 = sphi 0, %s51
      %s53 = sphi 0, %s51
      %s54 = sphi 0, %s53
      %s68 = sphi 0, %s54
      %s72 = sphi 0, %s72
      %s74 = sphi 0, %s72
      %s75 = sphi 0, %s74
      %s89 = sphi 0, %s75
      %s93 = sphi 0, %s93
      %s95 = sphi 0, %s93
      %s96 = sphi 0, %s95
      %s110 = sphi 0, %s96
      %s114 = sphi 0, %s114
      %s116 = sphi 0, %s114
      %s117 = sphi 0, %s116
      %s131 = sphi 0, %s117
      %s137 = sphi 0, %s139
      %s140 = sphi 0, %s137
      %s141 = sphi 0, %s140
      %s157 = sphi 0, %s141
    $region4: #{tpu_custom_call.1} parent=1 // loop_header_branch
      %20 = sbr.rel (%p18) target = $region8
    $region5: #{tpu_custom_call.1} parent=1 // loop_body
      %s22 = ssub.s32 %s17, 1
      %s23 = ssub.s32 %s17, 2
      %s24 = sadd.s32 %s17, 1
      %s25 = ssub.s32 %s17, %s24
      %p26 = scmp.eq.s32.totalorder %s25, 0
      %s28 = sadd.s32 %s27, 1
      %s29 = scalar_select %p26, %s27, %s28
      %p32 = pneg %p26
      %p33 = scmp.eq.s32.totalorder %s17, 1
      %p34 = por %p32, %p33
      %p35 = scmp.ne.s32.totalorder %s27, %s30
      %p36 = scmp.eq.s32.totalorder %s17, 0
      %p37 = por %p35, %p36
      %p38 = scmp.ne.s32.totalorder %s27, %s30
      %p39 = scmp.eq.s32.totalorder %s22, 1
      %p40 = por %p38, %p39
      %p41 = scmp.ne.s32.totalorder %s30, %s31
      %p42 = scmp.eq.s32.totalorder %s22, 0
      %p43 = por %p41, %p42
      %p44 = scmp.ne.s32.totalorder %s30, %s31
      %p45 = scmp.eq.s32.totalorder %s23, 1
      %p46 = por %p44, %p45
      %p48 = scmp.ne.s32.totalorder %s31, %s47
      %p49 = scmp.eq.s32.totalorder %s23, 0
      %p50 = por %p48, %p49
      %s52 = sadd.s32 %s51, 1
      %p55 = scmp.eq.s32.totalorder %s17, 1
      %p56 = scmp.ne.s32.totalorder %s51, %s53
      %p57 = scmp.eq.s32.totalorder %s17, 0
      %p58 = por %p56, %p57
      %p59 = scmp.ne.s32.totalorder %s51, %s53
      %p60 = scmp.eq.s32.totalorder %s22, 1
      %p61 = por %p59, %p60
      %p62 = scmp.ne.s32.totalorder %s53, %s54
      %p63 = scmp.eq.s32.totalorder %s22, 0
      %p64 = por %p62, %p63
      %p65 = scmp.ne.s32.totalorder %s53, %s54
      %p66 = scmp.eq.s32.totalorder %s23, 1
      %p67 = por %p65, %p66
      %p69 = scmp.ne.s32.totalorder %s54, %s68
      %p70 = scmp.eq.s32.totalorder %s23, 0
      %p71 = por %p69, %p70
      %s73 = sadd.s32 %s72, 1
      %p76 = scmp.eq.s32.totalorder %s17, 1
      %p77 = scmp.ne.s32.totalorder %s72, %s74
      %p78 = scmp.eq.s32.totalorder %s17, 0
      %p79 = por %p77, %p78
      %p80 = scmp.ne.s32.totalorder %s72, %s74
      %p81 = scmp.eq.s32.totalorder %s22, 1
      %p82 = por %p80, %p81
      %p83 = scmp.ne.s32.totalorder %s74, %s75
      %p84 = scmp.eq.s32.totalorder %s22, 0
      %p85 = por %p83, %p84
      %p86 = scmp.ne.s32.totalorder %s74, %s75
      %p87 = scmp.eq.s32.totalorder %s23, 1
      %p88 = por %p86, %p87
      %p90 = scmp.ne.s32.totalorder %s75, %s89
      %p91 = scmp.eq.s32.totalorder %s23, 0
      %p92 = por %p90, %p91
      %s94 = sadd.s32 %s93, 1
      %p97 = scmp.eq.s32.totalorder %s17, 1
      %p98 = scmp.ne.s32.totalorder %s93, %s95
      %p99 = scmp.eq.s32.totalorder %s17, 0
      %p100 = por %p98, %p99
      %p101 = scmp.ne.s32.totalorder %s93, %s95
      %p102 = scmp.eq.s32.totalorder %s22, 1
      %p103 = por %p101, %p102
      %p104 = scmp.ne.s32.totalorder %s95, %s96
      %p105 = scmp.eq.s32.totalorder %s22, 0
      %p106 = por %p104, %p105
      %p107 = scmp.ne.s32.totalorder %s95, %s96
      %p108 = scmp.eq.s32.totalorder %s23, 1
      %p109 = por %p107, %p108
      %p111 = scmp.ne.s32.totalorder %s96, %s110
      %p112 = scmp.eq.s32.totalorder %s23, 0
      %p113 = por %p111, %p112
      %s115 = sadd.s32 %s114, 1
      %p118 = scmp.eq.s32.totalorder %s17, 1
      %p119 = scmp.ne.s32.totalorder %s114, %s116
      %p120 = scmp.eq.s32.totalorder %s17, 0
      %p121 = por %p119, %p120
      %p122 = scmp.ne.s32.totalorder %s114, %s116
      %p123 = scmp.eq.s32.totalorder %s22, 1
      %p124 = por %p122, %p123
      %p125 = scmp.ne.s32.totalorder %s116, %s117
      %p126 = scmp.eq.s32.totalorder %s22, 0
      %p127 = por %p125, %p126
      %p128 = scmp.ne.s32.totalorder %s116, %s117
      %p129 = scmp.eq.s32.totalorder %s23, 1
      %p130 = por %p128, %p129
      %p132 = scmp.ne.s32.totalorder %s117, %s131
      %p133 = scmp.eq.s32.totalorder %s23, 0
      %p134 = por %p132, %p133
      %s135 = ssub.s32 %s17, %s24
      %p136 = scmp.eq.s32.totalorder %s135, 0
      %s138 = sadd.s32 %s137, 1
      %s139 = scalar_select %p136, %s137, %s138
      %p142 = pneg %p136
      %p143 = scmp.eq.s32.totalorder %s17, 1
      %p144 = por %p142, %p143
      %p145 = scmp.ne.s32.totalorder %s137, %s140
      %p146 = scmp.eq.s32.totalorder %s17, 0
      %p147 = por %p145, %p146
      %p148 = scmp.ne.s32.totalorder %s137, %s140
      %p149 = scmp.eq.s32.totalorder %s22, 1
      %p150 = por %p148, %p149
      %p151 = scmp.ne.s32.totalorder %s140, %s141
      %p152 = scmp.eq.s32.totalorder %s22, 0
      %p153 = por %p151, %p152
      %p154 = scmp.ne.s32.totalorder %s140, %s141
      %p155 = scmp.eq.s32.totalorder %s23, 1
      %p156 = por %p154, %p155
      %p158 = scmp.ne.s32.totalorder %s141, %s157
      %p159 = scmp.eq.s32.totalorder %s23, 0
      %p160 = por %p158, %p159
      %p161 = scmp.le.s32.totalorder 1, %s17
      %p162 = scmp.lt.s32.totalorder %s17, 3
      %p163 = pnand %p161, %p162
      %p164 = pneg %p163
      // Predicated region
      $region9: #{tpu_custom_call.1} parent=5 // pred_check
        _
      $region10: #{tpu_custom_call.1} parent=5 // pred_check_branch
        %166 = sbr.rel (%p163) target = $region12
      $region11: #{tpu_custom_call.1} parent=5 // pred_region
        %s167 = ssub.s32 %s17, 1
        // Predicated region
        $region13: #{tpu_custom_call.1} parent=11 // pred_check
          %p168 = pneg %p64
        $region14: #{tpu_custom_call.1} parent=11 // pred_check_branch
          %170 = sbr.rel (%p168) target = $region16
        $region15: #{tpu_custom_call.1} parent=11 // pred_region
          _
        $region16: #{tpu_custom_call.1} parent=11 // pred_fallthru
          _
        // Predicated region
        $region17: #{tpu_custom_call.1} parent=11 // pred_check
          %p171 = pneg %p85
        $region18: #{tpu_custom_call.1} parent=11 // pred_check_branch
          %173 = sbr.rel (%p171) target = $region20
        $region19: #{tpu_custom_call.1} parent=11 // pred_region
          _
        $region20: #{tpu_custom_call.1} parent=11 // pred_fallthru
          _
        // Predicated region
        $region21: #{tpu_custom_call.1} parent=11 // pred_check
          %p174 = pneg %p106
        $region22: #{tpu_custom_call.1} parent=11 // pred_check_branch
          %176 = sbr.rel (%p174) target = $region24
        $region23: #{tpu_custom_call.1} parent=11 // pred_region
          _
        $region24: #{tpu_custom_call.1} parent=11 // pred_fallthru
          _
        // Predicated region
        $region25: #{tpu_custom_call.1} parent=11 // pred_check
          %p177 = pneg %p127
        $region26: #{tpu_custom_call.1} parent=11 // pred_check_branch
          %179 = sbr.rel (%p177) target = $region28
        $region27: #{tpu_custom_call.1} parent=11 // pred_region
          _
        $region28: #{tpu_custom_call.1} parent=11 // pred_fallthru
          _
      $region12: #{tpu_custom_call.1} parent=5 // pred_fallthru
        _
      %p180 = scmp.lt.s32.totalorder %s17, 2
      // Predicated region
      $region29: #{tpu_custom_call.1} parent=5 // pred_check
        %p181 = pneg %p180
      $region30: #{tpu_custom_call.1} parent=5 // pred_check_branch
        %183 = sbr.rel (%p181) target = $region32
      $region31: #{tpu_custom_call.1} parent=5 // pred_region
        // Predicated region
        $region33: #{tpu_custom_call.1} parent=31 // pred_check
          %p184 = pneg %p37
        $region34: #{tpu_custom_call.1} parent=31 // pred_check_branch
          %186 = sbr.rel (%p184) target = $region36
        $region35: #{tpu_custom_call.1} parent=31 // pred_region
          %s187 = sand.u32 %s27, 1
          %s188 = scalar_lea.sflag [#allocation3], %s187
          %s189 = sand.u32 %s27, 1
          %s190 = smul.addr %s189, 64
          %s191 = scalar_lea.vmem [#allocation2], %s190
          %s193 = ssub.s32 1024, 1024
          %194 = vsyncadd %s188, %s193
          %s195 = smul.addr %s17, 8
          %s196 = smul.addr %s195, 128
          %s197 = scalar_lea.hbm %s0, %s196
          %s198 = sshll.u32 %s191, 4
          %s199 = int_to_ptr.vmem [resolvable:$true] %s198
          %204 = dma.hbm_to_vmem [thread:$0]  %s197, 1024, %s199, %s188, 256, 256, 16
        $region36: #{tpu_custom_call.1} parent=31 // pred_fallthru
          _
      $region32: #{tpu_custom_call.1} parent=5 // pred_fallthru
        _
      %p205 = scmp.le.s32.totalorder 1, %s17
      %p206 = scmp.lt.s32.totalorder %s17, 3
      %p207 = pnand %p205, %p206
      %p208 = pneg %p207
      // Predicated region
      $region37: #{tpu_custom_call.1} parent=5 // pred_check
        _
      $region38: #{tpu_custom_call.1} parent=5 // pred_check_branch
        %210 = sbr.rel (%p207) target = $region40
      $region39: #{tpu_custom_call.1} parent=5 // pred_region
        %s211 = ssub.s32 %s17, 1
        %s212 = sand.u32 %s30, 1
        %s213 = scalar_lea.sflag [#allocation3], %s212
        %s214 = sand.u32 %s30, 1
        %s215 = smul.addr %s214, 64
        %s216 = scalar_lea.vmem [#allocation2], %s215
        // Predicated region
        $region41: #{tpu_custom_call.1} parent=39 // pred_check
          %p217 = pneg %p43
        $region42: #{tpu_custom_call.1} parent=39 // pred_check_branch
          %219 = sbr.rel (%p217) target = $region44
        $region43: #{tpu_custom_call.1} parent=39 // pred_region
          %220 = dma.done %s213, 1024
        $region44: #{tpu_custom_call.1} parent=39 // pred_fallthru
          _
        %s221 = sand.u32 %s30, 1
        %s222 = scalar_lea.sflag [#allocation3], %s221
        %s223 = sand.u32 %s30, 1
        %s224 = smul.addr %s223, 64
        %s225 = scalar_lea.vmem [#allocation2], %s224
        %p226 = pneg %p43
        %p227 = pneg %p40
        %p228 = pneg %p64
        %p229 = pneg %p61
        %p230 = pneg %p85
        %p231 = pneg %p82
        %p232 = pneg %p106
        %p233 = pneg %p103
        %p234 = pneg %p127
        %p235 = pneg %p124
        %p236 = pneg %p153
        %p237 = pneg %p150
        %s238 = sand.u32 %s140, 1
        %s239 = scalar_lea.sflag [#allocation4], %s238
        %s240 = sand.u32 %s140, 1
        %s241 = smul.addr %s240, 64
        %s242 = scalar_lea.vmem [#allocation5], %s241
        %v243 = vld [vmem:[%s216] sm:$0xff]
        %v244 = vld [vmem:[%s216 + $0x8] sm:$0xff]
        %v245 = vld [vmem:[%s216 + $0x10] sm:$0xff]
        %v246 = vld [vmem:[%s216 + $0x18] sm:$0xff]
        %v247 = vld [vmem:[%s216 + $0x20] sm:$0xff]
        %v248 = vld [vmem:[%s216 + $0x28] sm:$0xff]
        %v249 = vld [vmem:[%s216 + $0x30] sm:$0xff]
        %v250 = vld [vmem:[%s216 + $0x38] sm:$0xff]
        %v251 = vadd.f32 %v243, %v244
        %252 = vadd.xlane.f32.xlu0 %v251
        %v253 = vpop.xlane.xlu0 %252
        %v254 = vadd.f32 %v245, %v246
        %255 = vadd.xlane.f32.xlu0 %v254
        %v256 = vpop.xlane.xlu0 %255
        %v257 = vadd.f32 %v247, %v248
        %258 = vadd.xlane.f32.xlu0 %v257
        %v259 = vpop.xlane.xlu0 %258
        %v260 = vadd.f32 %v249, %v250
        %261 = vadd.xlane.f32.xlu0 %v260
        %v262 = vpop.xlane.xlu0 %261
        %v263 = vrcp.pop 256.0
        %v264 = vmul.f32 %v253, %v263
        %v265 = vmul.f32 %v256, %v263
        %v266 = vmul.f32 %v259, %v263
        %v267 = vmul.f32 %v262, %v263
        %v268 = vld [vmem:[%s1] sm:$0x3]
        %v269 = vld [vmem:[%s3] sm:$0xff]
        %v270 = vld [vmem:[%s3 + $0x8] sm:$0xff]
        %v271 = vld [vmem:[%s3 + $0x10] sm:$0xff]
        %v272 = vld [vmem:[%s3 + $0x18] sm:$0xff]
        %v274 = vlaneseq
        %v275 = vshrl.u32 %v274, 7
        %v276 = vsub.s32 0, %v275
        %v277 = vrot.slane %v268, %v276
        %279 = vbcast.lane.b32.xlu0 %v277, 256
        %v280 = vpop.permute.xlu0 %279
        %s282 = sor.u32 256, 8
        %283 = vbcast.lane.b32.xlu0 %v277, %s282
        %v284 = vpop.permute.xlu0 %283
        %s286 = sor.u32 256, 16
        %287 = vbcast.lane.b32.xlu0 %v277, %s286
        %v288 = vpop.permute.xlu0 %287
        %s290 = sor.u32 256, 24
        %291 = vbcast.lane.b32.xlu0 %v277, %s290
        %v292 = vpop.permute.xlu0 %291
        %v293 = vlaneseq
        %v294 = vshrl.u32 %v293, 7
        %v295 = vsub.s32 1, %v294
        %v296 = vrot.slane %v268, %v295
        %298 = vbcast.lane.b32.xlu0 %v296, 256
        %v299 = vpop.permute.xlu0 %298
        %s301 = sor.u32 256, 8
        %302 = vbcast.lane.b32.xlu0 %v296, %s301
        %v303 = vpop.permute.xlu0 %302
        %s305 = sor.u32 256, 16
        %306 = vbcast.lane.b32.xlu0 %v296, %s305
        %v307 = vpop.permute.xlu0 %306
        %s309 = sor.u32 256, 24
        %310 = vbcast.lane.b32.xlu0 %v296, %s309
        %v311 = vpop.permute.xlu0 %310
        %v320 = vmul.f32 %v264, %v280
        %v321 = vmul.f32 %v265, %v284
        %v322 = vmul.f32 %v266, %v288
        %v323 = vmul.f32 %v267, %v292
        %v324 = vmul.f32 %v264, %v299
        %v325 = vmul.f32 %v265, %v303
        %v326 = vmul.f32 %v266, %v307
        %v327 = vmul.f32 %v267, %v311
        %336 = vset.pattern.permute.xlu0 0
        %337 = vperm.xlu0 %336, %v320
        %v338 = vpop.permute.xlu0 %337
        %339 = vset.pattern.permute.xlu0 0
        %340 = vperm.xlu0 %339, %v321
        %v341 = vpop.permute.xlu0 %340
        %342 = vset.pattern.permute.xlu0 0
        %343 = vperm.xlu0 %342, %v322
        %v344 = vpop.permute.xlu0 %343
        %345 = vset.pattern.permute.xlu0 0
        %346 = vperm.xlu0 %345, %v323
        %v347 = vpop.permute.xlu0 %346
        %348 = vset.pattern.permute.xlu0 0
        %349 = vperm.xlu0 %348, %v324
        %v350 = vpop.permute.xlu0 %349
        %351 = vset.pattern.permute.xlu0 0
        %352 = vperm.xlu0 %351, %v325
        %v353 = vpop.permute.xlu0 %352
        %354 = vset.pattern.permute.xlu0 0
        %355 = vperm.xlu0 %354, %v326
        %v356 = vpop.permute.xlu0 %355
        %357 = vset.pattern.permute.xlu0 0
        %358 = vperm.xlu0 %357, %v327
        %v359 = vpop.permute.xlu0 %358
        %v360 = vlaneseq
        %v361 = vand.u32 %v360, 127
        %v362 = vlaneseq
        %v363 = vshrl.u32 %v362, 7
        %v364 = vsub.s32 %v361, %v363
        %v365 = vrot.slane %v338, %v364
        %v366 = vadd.s32 %v361, 4294967288
        %v367 = vlaneseq
        %v368 = vshrl.u32 %v367, 7
        %v369 = vsub.s32 %v366, %v368
        %v370 = vrot.slane %v341, %v369
        %vm371 = vcmask 130112
        %v372 = vsel %vm371, %v370, %v365
        %v373 = vadd.s32 %v361, 4294967280
        %v374 = vlaneseq
        %v375 = vshrl.u32 %v374, 7
        %v376 = vsub.s32 %v373, %v375
        %v377 = vrot.slane %v344, %v376
        %vm378 = vcmask 195712
        %v379 = vsel %vm378, %v377, %v372
        %v380 = vadd.s32 %v361, 4294967272
        %v381 = vlaneseq
        %v382 = vshrl.u32 %v381, 7
        %v383 = vsub.s32 %v380, %v382
        %v384 = vrot.slane %v347, %v383
        %vm385 = vcmask 261312
        %v386 = vsel %vm385, %v384, %v379
        %v387 = vlaneseq
        %v388 = vshrl.u32 %v387, 7
        %v389 = vsub.s32 %v361, %v388
        %v390 = vrot.slane %v350, %v389
        %v391 = vlaneseq
        %v392 = vshrl.u32 %v391, 7
        %v393 = vsub.s32 %v366, %v392
        %v394 = vrot.slane %v353, %v393
        %v395 = vsel %vm371, %v394, %v390
        %v396 = vlaneseq
        %v397 = vshrl.u32 %v396, 7
        %v398 = vsub.s32 %v373, %v397
        %v399 = vrot.slane %v356, %v398
        %v400 = vsel %vm378, %v399, %v395
        %v401 = vlaneseq
        %v402 = vshrl.u32 %v401, 7
        %v403 = vsub.s32 %v380, %v402
        %v404 = vrot.slane %v359, %v403
        %v405 = vsel %vm385, %v404, %v400
        %vm406 = vcmask 1041409
        %v407 = vsel %vm406, %v405, %v386
        %vm409 = vcmask 254976
        %v410 = vsel %vm409, %v407, 0.0
        %411 = vadd.xlane.f32.xlu0 %v410
        %v412 = vpop.xlane.xlu0 %411
        %v413 = vld [vmem:[%s2] sm:$0x1]
        %v415 = vlaneseq
        %v416 = vshrl.u32 %v415, 7
        %v417 = vsub.s32 0, %v416
        %v418 = vrot.slane %v413, %v417
        %420 = vbcast.lane.b32.xlu0 %v418, 256
        %v421 = vpop.permute.xlu0 %420
        %v423 = vadd.f32 %v412, %v421
        %v424 = vmax.f32 %v423, 0.0
        %v429 = vlaneseq
        %v430 = vshrl.u32 %v429, 7
        %v431 = vsub.s32 0, %v430
        %v432 = vrot.slane %v269, %v431
        %434 = vbcast.lane.b32.xlu0 %v432, 256
        %v435 = vpop.permute.xlu0 %434
        %v436 = vlaneseq
        %v437 = vshrl.u32 %v436, 7
        %v438 = vsub.s32 1, %v437
        %v439 = vrot.slane %v269, %v438
        %441 = vbcast.lane.b32.xlu0 %v439, 256
        %v442 = vpop.permute.xlu0 %441
        %v443 = vlaneseq
        %v444 = vshrl.u32 %v443, 7
        %v445 = vsub.s32 2, %v444
        %v446 = vrot.slane %v269, %v445
        %448 = vbcast.lane.b32.xlu0 %v446, 256
        %v449 = vpop.permute.xlu0 %448
        %v450 = vlaneseq
        %v451 = vshrl.u32 %v450, 7
        %v452 = vsub.s32 3, %v451
        %v453 = vrot.slane %v269, %v452
        %455 = vbcast.lane.b32.xlu0 %v453, 256
        %v456 = vpop.permute.xlu0 %455
        %v457 = vlaneseq
        %v458 = vshrl.u32 %v457, 7
        %v459 = vsub.s32 4, %v458
        %v460 = vrot.slane %v269, %v459
        %462 = vbcast.lane.b32.xlu0 %v460, 256
        %v463 = vpop.permute.xlu0 %462
        %v464 = vlaneseq
        %v465 = vshrl.u32 %v464, 7
        %v466 = vsub.s32 5, %v465
        %v467 = vrot.slane %v269, %v466
        %469 = vbcast.lane.b32.xlu0 %v467, 256
        %v470 = vpop.permute.xlu0 %469
        %v471 = vlaneseq
        %v472 = vshrl.u32 %v471, 7
        %v473 = vsub.s32 6, %v472
        %v474 = vrot.slane %v269, %v473
        %476 = vbcast.lane.b32.xlu0 %v474, 256
        %v477 = vpop.permute.xlu0 %476
        %v478 = vlaneseq
        %v479 = vshrl.u32 %v478, 7
        %v480 = vsub.s32 7, %v479
        %v481 = vrot.slane %v269, %v480
        %483 = vbcast.lane.b32.xlu0 %v481, 256
        %v484 = vpop.permute.xlu0 %483
        %v485 = vlaneseq
        %v486 = vshrl.u32 %v485, 7
        %v487 = vsub.s32 0, %v486
        %v488 = vrot.slane %v270, %v487
        %490 = vbcast.lane.b32.xlu0 %v488, 256
        %v491 = vpop.permute.xlu0 %490
        %v492 = vlaneseq
        %v493 = vshrl.u32 %v492, 7
        %v494 = vsub.s32 1, %v493
        %v495 = vrot.slane %v270, %v494
        %497 = vbcast.lane.b32.xlu0 %v495, 256
        %v498 = vpop.permute.xlu0 %497
        %v499 = vlaneseq
        %v500 = vshrl.u32 %v499, 7
        %v501 = vsub.s32 2, %v500
        %v502 = vrot.slane %v270, %v501
        %504 = vbcast.lane.b32.xlu0 %v502, 256
        %v505 = vpop.permute.xlu0 %504
        %v506 = vlaneseq
        %v507 = vshrl.u32 %v506, 7
        %v508 = vsub.s32 3, %v507
        %v509 = vrot.slane %v270, %v508
        %511 = vbcast.lane.b32.xlu0 %v509, 256
        %v512 = vpop.permute.xlu0 %511
        %v513 = vlaneseq
        %v514 = vshrl.u32 %v513, 7
        %v515 = vsub.s32 4, %v514
        %v516 = vrot.slane %v270, %v515
        %518 = vbcast.lane.b32.xlu0 %v516, 256
        %v519 = vpop.permute.xlu0 %518
        %v520 = vlaneseq
        %v521 = vshrl.u32 %v520, 7
        %v522 = vsub.s32 5, %v521
        %v523 = vrot.slane %v270, %v522
        %525 = vbcast.lane.b32.xlu0 %v523, 256
        %v526 = vpop.permute.xlu0 %525
        %v527 = vlaneseq
        %v528 = vshrl.u32 %v527, 7
        %v529 = vsub.s32 6, %v528
        %v530 = vrot.slane %v270, %v529
        %532 = vbcast.lane.b32.xlu0 %v530, 256
        %v533 = vpop.permute.xlu0 %532
        %v534 = vlaneseq
        %v535 = vshrl.u32 %v534, 7
        %v536 = vsub.s32 7, %v535
        %v537 = vrot.slane %v270, %v536
        %539 = vbcast.lane.b32.xlu0 %v537, 256
        %v540 = vpop.permute.xlu0 %539
        %v541 = vlaneseq
        %v542 = vshrl.u32 %v541, 7
        %v543 = vsub.s32 0, %v542
        %v544 = vrot.slane %v271, %v543
        %546 = vbcast.lane.b32.xlu0 %v544, 256
        %v547 = vpop.permute.xlu0 %546
        %v548 = vlaneseq
        %v549 = vshrl.u32 %v548, 7
        %v550 = vsub.s32 1, %v549
        %v551 = vrot.slane %v271, %v550
        %553 = vbcast.lane.b32.xlu0 %v551, 256
        %v554 = vpop.permute.xlu0 %553
        %v555 = vlaneseq
        %v556 = vshrl.u32 %v555, 7
        %v557 = vsub.s32 2, %v556
        %v558 = vrot.slane %v271, %v557
        %560 = vbcast.lane.b32.xlu0 %v558, 256
        %v561 = vpop.permute.xlu0 %560
        %v562 = vlaneseq
        %v563 = vshrl.u32 %v562, 7
        %v564 = vsub.s32 3, %v563
        %v565 = vrot.slane %v271, %v564
        %567 = vbcast.lane.b32.xlu0 %v565, 256
        %v568 = vpop.permute.xlu0 %567
        %v569 = vlaneseq
        %v570 = vshrl.u32 %v569, 7
        %v571 = vsub.s32 4, %v570
        %v572 = vrot.slane %v271, %v571
        %574 = vbcast.lane.b32.xlu0 %v572, 256
        %v575 = vpop.permute.xlu0 %574
        %v576 = vlaneseq
        %v577 = vshrl.u32 %v576, 7
        %v578 = vsub.s32 5, %v577
        %v579 = vrot.slane %v271, %v578
        %581 = vbcast.lane.b32.xlu0 %v579, 256
        %v582 = vpop.permute.xlu0 %581
        %v583 = vlaneseq
        %v584 = vshrl.u32 %v583, 7
        %v585 = vsub.s32 6, %v584
        %v586 = vrot.slane %v271, %v585
        %588 = vbcast.lane.b32.xlu0 %v586, 256
        %v589 = vpop.permute.xlu0 %588
        %v590 = vlaneseq
        %v591 = vshrl.u32 %v590, 7
        %v592 = vsub.s32 7, %v591
        %v593 = vrot.slane %v271, %v592
        %595 = vbcast.lane.b32.xlu0 %v593, 256
        %v596 = vpop.permute.xlu0 %595
        %v597 = vlaneseq
        %v598 = vshrl.u32 %v597, 7
        %v599 = vsub.s32 0, %v598
        %v600 = vrot.slane %v272, %v599
        %602 = vbcast.lane.b32.xlu0 %v600, 256
        %v603 = vpop.permute.xlu0 %602
        %v604 = vlaneseq
        %v605 = vshrl.u32 %v604, 7
        %v606 = vsub.s32 1, %v605
        %v607 = vrot.slane %v272, %v606
        %609 = vbcast.lane.b32.xlu0 %v607, 256
        %v610 = vpop.permute.xlu0 %609
        %v611 = vlaneseq
        %v612 = vshrl.u32 %v611, 7
        %v613 = vsub.s32 2, %v612
        %v614 = vrot.slane %v272, %v613
        %616 = vbcast.lane.b32.xlu0 %v614, 256
        %v617 = vpop.permute.xlu0 %616
        %v618 = vlaneseq
        %v619 = vshrl.u32 %v618, 7
        %v620 = vsub.s32 3, %v619
        %v621 = vrot.slane %v272, %v620
        %623 = vbcast.lane.b32.xlu0 %v621, 256
        %v624 = vpop.permute.xlu0 %623
        %v625 = vlaneseq
        %v626 = vshrl.u32 %v625, 7
        %v627 = vsub.s32 4, %v626
        %v628 = vrot.slane %v272, %v627
        %630 = vbcast.lane.b32.xlu0 %v628, 256
        %v631 = vpop.permute.xlu0 %630
        %v632 = vlaneseq
        %v633 = vshrl.u32 %v632, 7
        %v634 = vsub.s32 5, %v633
        %v635 = vrot.slane %v272, %v634
        %637 = vbcast.lane.b32.xlu0 %v635, 256
        %v638 = vpop.permute.xlu0 %637
        %v639 = vlaneseq
        %v640 = vshrl.u32 %v639, 7
        %v641 = vsub.s32 6, %v640
        %v642 = vrot.slane %v272, %v641
        %644 = vbcast.lane.b32.xlu0 %v642, 256
        %v645 = vpop.permute.xlu0 %644
        %v646 = vlaneseq
        %v647 = vshrl.u32 %v646, 7
        %v648 = vsub.s32 7, %v647
        %v649 = vrot.slane %v272, %v648
        %651 = vbcast.lane.b32.xlu0 %v649, 256
        %v652 = vpop.permute.xlu0 %651
        %v685 = vmul.f32 %v424, %v435
        %v686 = vmul.f32 %v424, %v442
        %v687 = vmul.f32 %v424, %v449
        %v688 = vmul.f32 %v424, %v456
        %v689 = vmul.f32 %v424, %v463
        %v690 = vmul.f32 %v424, %v470
        %v691 = vmul.f32 %v424, %v477
        %v692 = vmul.f32 %v424, %v484
        %v693 = vmul.f32 %v424, %v491
        %v694 = vmul.f32 %v424, %v498
        %v695 = vmul.f32 %v424, %v505
        %v696 = vmul.f32 %v424, %v512
        %v697 = vmul.f32 %v424, %v519
        %v698 = vmul.f32 %v424, %v526
        %v699 = vmul.f32 %v424, %v533
        %v700 = vmul.f32 %v424, %v540
        %v701 = vmul.f32 %v424, %v547
        %v702 = vmul.f32 %v424, %v554
        %v703 = vmul.f32 %v424, %v561
        %v704 = vmul.f32 %v424, %v568
        %v705 = vmul.f32 %v424, %v575
        %v706 = vmul.f32 %v424, %v582
        %v707 = vmul.f32 %v424, %v589
        %v708 = vmul.f32 %v424, %v596
        %v709 = vmul.f32 %v424, %v603
        %v710 = vmul.f32 %v424, %v610
        %v711 = vmul.f32 %v424, %v617
        %v712 = vmul.f32 %v424, %v624
        %v713 = vmul.f32 %v424, %v631
        %v714 = vmul.f32 %v424, %v638
        %v715 = vmul.f32 %v424, %v645
        %v716 = vmul.f32 %v424, %v652
        %749 = vset.pattern.permute.xlu0 0
        %750 = vperm.xlu0 %749, %v685
        %v751 = vpop.permute.xlu0 %750
        %752 = vset.pattern.permute.xlu0 0
        %753 = vperm.xlu0 %752, %v686
        %v754 = vpop.permute.xlu0 %753
        %755 = vset.pattern.permute.xlu0 0
        %756 = vperm.xlu0 %755, %v687
        %v757 = vpop.permute.xlu0 %756
        %758 = vset.pattern.permute.xlu0 0
        %759 = vperm.xlu0 %758, %v688
        %v760 = vpop.permute.xlu0 %759
        %761 = vset.pattern.permute.xlu0 0
        %762 = vperm.xlu0 %761, %v689
        %v763 = vpop.permute.xlu0 %762
        %764 = vset.pattern.permute.xlu0 0
        %765 = vperm.xlu0 %764, %v690
        %v766 = vpop.permute.xlu0 %765
        %767 = vset.pattern.permute.xlu0 0
        %768 = vperm.xlu0 %767, %v691
        %v769 = vpop.permute.xlu0 %768
        %770 = vset.pattern.permute.xlu0 0
        %771 = vperm.xlu0 %770, %v692
        %v772 = vpop.permute.xlu0 %771
        %773 = vset.pattern.permute.xlu0 0
        %774 = vperm.xlu0 %773, %v693
        %v775 = vpop.permute.xlu0 %774
        %776 = vset.pattern.permute.xlu0 0
        %777 = vperm.xlu0 %776, %v694
        %v778 = vpop.permute.xlu0 %777
        %779 = vset.pattern.permute.xlu0 0
        %780 = vperm.xlu0 %779, %v695
        %v781 = vpop.permute.xlu0 %780
        %782 = vset.pattern.permute.xlu0 0
        %783 = vperm.xlu0 %782, %v696
        %v784 = vpop.permute.xlu0 %783
        %785 = vset.pattern.permute.xlu0 0
        %786 = vperm.xlu0 %785, %v697
        %v787 = vpop.permute.xlu0 %786
        %788 = vset.pattern.permute.xlu0 0
        %789 = vperm.xlu0 %788, %v698
        %v790 = vpop.permute.xlu0 %789
        %791 = vset.pattern.permute.xlu0 0
        %792 = vperm.xlu0 %791, %v699
        %v793 = vpop.permute.xlu0 %792
        %794 = vset.pattern.permute.xlu0 0
        %795 = vperm.xlu0 %794, %v700
        %v796 = vpop.permute.xlu0 %795
        %797 = vset.pattern.permute.xlu0 0
        %798 = vperm.xlu0 %797, %v701
        %v799 = vpop.permute.xlu0 %798
        %800 = vset.pattern.permute.xlu0 0
        %801 = vperm.xlu0 %800, %v702
        %v802 = vpop.permute.xlu0 %801
        %803 = vset.pattern.permute.xlu0 0
        %804 = vperm.xlu0 %803, %v703
        %v805 = vpop.permute.xlu0 %804
        %806 = vset.pattern.permute.xlu0 0
        %807 = vperm.xlu0 %806, %v704
        %v808 = vpop.permute.xlu0 %807
        %809 = vset.pattern.permute.xlu0 0
        %810 = vperm.xlu0 %809, %v705
        %v811 = vpop.permute.xlu0 %810
        %812 = vset.pattern.permute.xlu0 0
        %813 = vperm.xlu0 %812, %v706
        %v814 = vpop.permute.xlu0 %813
        %815 = vset.pattern.permute.xlu0 0
        %816 = vperm.xlu0 %815, %v707
        %v817 = vpop.permute.xlu0 %816
        %818 = vset.pattern.permute.xlu0 0
        %819 = vperm.xlu0 %818, %v708
        %v820 = vpop.permute.xlu0 %819
        %821 = vset.pattern.permute.xlu0 0
        %822 = vperm.xlu0 %821, %v709
        %v823 = vpop.permute.xlu0 %822
        %824 = vset.pattern.permute.xlu0 0
        %825 = vperm.xlu0 %824, %v710
        %v826 = vpop.permute.xlu0 %825
        %827 = vset.pattern.permute.xlu0 0
        %828 = vperm.xlu0 %827, %v711
        %v829 = vpop.permute.xlu0 %828
        %830 = vset.pattern.permute.xlu0 0
        %831 = vperm.xlu0 %830, %v712
        %v832 = vpop.permute.xlu0 %831
        %833 = vset.pattern.permute.xlu0 0
        %834 = vperm.xlu0 %833, %v713
        %v835 = vpop.permute.xlu0 %834
        %836 = vset.pattern.permute.xlu0 0
        %837 = vperm.xlu0 %836, %v714
        %v838 = vpop.permute.xlu0 %837
        %839 = vset.pattern.permute.xlu0 0
        %840 = vperm.xlu0 %839, %v715
        %v841 = vpop.permute.xlu0 %840
        %842 = vset.pattern.permute.xlu0 0
        %843 = vperm.xlu0 %842, %v716
        %v844 = vpop.permute.xlu0 %843
        %v845 = vlaneseq
        %v846 = vshrl.u32 %v845, 7
        %v847 = vsub.s32 %v361, %v846
        %v848 = vrot.slane %v751, %v847
        %v849 = vlaneseq
        %v850 = vshrl.u32 %v849, 7
        %v851 = vsub.s32 %v361, %v850
        %v852 = vrot.slane %v754, %v851
        %v853 = vlaneseq
        %v854 = vshrl.u32 %v853, 7
        %v855 = vsub.s32 %v361, %v854
        %v856 = vrot.slane %v757, %v855
        %v857 = vlaneseq
        %v858 = vshrl.u32 %v857, 7
        %v859 = vsub.s32 %v361, %v858
        %v860 = vrot.slane %v760, %v859
        %v861 = vlaneseq
        %v862 = vshrl.u32 %v861, 7
        %v863 = vsub.s32 %v361, %v862
        %v864 = vrot.slane %v763, %v863
        %v865 = vlaneseq
        %v866 = vshrl.u32 %v865, 7
        %v867 = vsub.s32 %v361, %v866
        %v868 = vrot.slane %v766, %v867
        %v869 = vlaneseq
        %v870 = vshrl.u32 %v869, 7
        %v871 = vsub.s32 %v361, %v870
        %v872 = vrot.slane %v769, %v871
        %v873 = vlaneseq
        %v874 = vshrl.u32 %v873, 7
        %v875 = vsub.s32 %v361, %v874
        %v876 = vrot.slane %v772, %v875
        %v877 = vlaneseq
        %v878 = vshrl.u32 %v877, 7
        %v879 = vsub.s32 %v361, %v878
        %v880 = vrot.slane %v775, %v879
        %v881 = vlaneseq
        %v882 = vshrl.u32 %v881, 7
        %v883 = vsub.s32 %v361, %v882
        %v884 = vrot.slane %v778, %v883
        %v885 = vlaneseq
        %v886 = vshrl.u32 %v885, 7
        %v887 = vsub.s32 %v361, %v886
        %v888 = vrot.slane %v781, %v887
        %v889 = vlaneseq
        %v890 = vshrl.u32 %v889, 7
        %v891 = vsub.s32 %v361, %v890
        %v892 = vrot.slane %v784, %v891
        %v893 = vlaneseq
        %v894 = vshrl.u32 %v893, 7
        %v895 = vsub.s32 %v361, %v894
        %v896 = vrot.slane %v787, %v895
        %v897 = vlaneseq
        %v898 = vshrl.u32 %v897, 7
        %v899 = vsub.s32 %v361, %v898
        %v900 = vrot.slane %v790, %v899
        %v901 = vlaneseq
        %v902 = vshrl.u32 %v901, 7
        %v903 = vsub.s32 %v361, %v902
        %v904 = vrot.slane %v793, %v903
        %v905 = vlaneseq
        %v906 = vshrl.u32 %v905, 7
        %v907 = vsub.s32 %v361, %v906
        %v908 = vrot.slane %v796, %v907
        %v909 = vlaneseq
        %v910 = vshrl.u32 %v909, 7
        %v911 = vsub.s32 %v361, %v910
        %v912 = vrot.slane %v799, %v911
        %v913 = vlaneseq
        %v914 = vshrl.u32 %v913, 7
        %v915 = vsub.s32 %v361, %v914
        %v916 = vrot.slane %v802, %v915
        %v917 = vlaneseq
        %v918 = vshrl.u32 %v917, 7
        %v919 = vsub.s32 %v361, %v918
        %v920 = vrot.slane %v805, %v919
        %v921 = vlaneseq
        %v922 = vshrl.u32 %v921, 7
        %v923 = vsub.s32 %v361, %v922
        %v924 = vrot.slane %v808, %v923
        %v925 = vlaneseq
        %v926 = vshrl.u32 %v925, 7
        %v927 = vsub.s32 %v361, %v926
        %v928 = vrot.slane %v811, %v927
        %v929 = vlaneseq
        %v930 = vshrl.u32 %v929, 7
        %v931 = vsub.s32 %v361, %v930
        %v932 = vrot.slane %v814, %v931
        %v933 = vlaneseq
        %v934 = vshrl.u32 %v933, 7
        %v935 = vsub.s32 %v361, %v934
        %v936 = vrot.slane %v817, %v935
        %v937 = vlaneseq
        %v938 = vshrl.u32 %v937, 7
        %v939 = vsub.s32 %v361, %v938
        %v940 = vrot.slane %v820, %v939
        %v941 = vlaneseq
        %v942 = vshrl.u32 %v941, 7
        %v943 = vsub.s32 %v361, %v942
        %v944 = vrot.slane %v823, %v943
        %v945 = vlaneseq
        %v946 = vshrl.u32 %v945, 7
        %v947 = vsub.s32 %v361, %v946
        %v948 = vrot.slane %v826, %v947
        %v949 = vlaneseq
        %v950 = vshrl.u32 %v949, 7
        %v951 = vsub.s32 %v361, %v950
        %v952 = vrot.slane %v829, %v951
        %v953 = vlaneseq
        %v954 = vshrl.u32 %v953, 7
        %v955 = vsub.s32 %v361, %v954
        %v956 = vrot.slane %v832, %v955
        %v957 = vlaneseq
        %v958 = vshrl.u32 %v957, 7
        %v959 = vsub.s32 %v361, %v958
        %v960 = vrot.slane %v835, %v959
        %v961 = vlaneseq
        %v962 = vshrl.u32 %v961, 7
        %v963 = vsub.s32 %v361, %v962
        %v964 = vrot.slane %v838, %v963
        %v965 = vlaneseq
        %v966 = vshrl.u32 %v965, 7
        %v967 = vsub.s32 %v361, %v966
        %v968 = vrot.slane %v841, %v967
        %v969 = vlaneseq
        %v970 = vshrl.u32 %v969, 7
        %v971 = vsub.s32 %v361, %v970
        %v972 = vrot.slane %v844, %v971
        %v973 = vsel %vm406, %v852, %v848
        %vm974 = vcmask 1042434
        %v975 = vsel %vm974, %v856, %v973
        %vm976 = vcmask 1043459
        %v977 = vsel %vm976, %v860, %v975
        %vm978 = vcmask 1044484
        %v979 = vsel %vm978, %v864, %v977
        %vm980 = vcmask 1045509
        %v981 = vsel %vm980, %v868, %v979
        %vm982 = vcmask 1046534
        %v983 = vsel %vm982, %v872, %v981
        %vm984 = vcmask 1047559
        %v985 = vsel %vm984, %v876, %v983
        %v986 = vsel %vm406, %v884, %v880
        %v987 = vsel %vm974, %v888, %v986
        %v988 = vsel %vm976, %v892, %v987
        %v989 = vsel %vm978, %v896, %v988
        %v990 = vsel %vm980, %v900, %v989
        %v991 = vsel %vm982, %v904, %v990
        %v992 = vsel %vm984, %v908, %v991
        %v993 = vsel %vm406, %v916, %v912
        %v994 = vsel %vm974, %v920, %v993
        %v995 = vsel %vm976, %v924, %v994
        %v996 = vsel %vm978, %v928, %v995
        %v997 = vsel %vm980, %v932, %v996
        %v998 = vsel %vm982, %v936, %v997
        %v999 = vsel %vm984, %v940, %v998
        %v1000 = vsel %vm406, %v948, %v944
        %v1001 = vsel %vm974, %v952, %v1000
        %v1002 = vsel %vm976, %v956, %v1001
        %v1003 = vsel %vm978, %v960, %v1002
        %v1004 = vsel %vm980, %v964, %v1003
        %v1005 = vsel %vm982, %v968, %v1004
        %v1006 = vsel %vm984, %v972, %v1005
        %vm1011 = vcmask 15360
        %v1012 = vsel %vm1011, %v985, 0.0
        %1013 = vadd.xlane.f32.xlu0 %v1012
        %v1014 = vpop.xlane.xlu0 %1013
        %v1015 = vsel %vm1011, %v992, 0.0
        %1016 = vadd.xlane.f32.xlu0 %v1015
        %v1017 = vpop.xlane.xlu0 %1016
        %v1018 = vsel %vm1011, %v999, 0.0
        %1019 = vadd.xlane.f32.xlu0 %v1018
        %v1020 = vpop.xlane.xlu0 %1019
        %v1021 = vsel %vm1011, %v1006, 0.0
        %1022 = vadd.xlane.f32.xlu0 %v1021
        %v1023 = vpop.xlane.xlu0 %1022
        %v1024 = vld [vmem:[%s4] sm:$0x1]
        %v1026 = vlaneseq
        %v1027 = vshrl.u32 %v1026, 7
        %v1028 = vsub.s32 0, %v1027
        %v1029 = vrot.slane %v1024, %v1028
        %1031 = vbcast.lane.b32.xlu0 %v1029, 256
        %v1032 = vpop.permute.xlu0 %1031
        %s1034 = sor.u32 256, 8
        %1035 = vbcast.lane.b32.xlu0 %v1029, %s1034
        %v1036 = vpop.permute.xlu0 %1035
        %s1038 = sor.u32 256, 16
        %1039 = vbcast.lane.b32.xlu0 %v1029, %s1038
        %v1040 = vpop.permute.xlu0 %1039
        %s1042 = sor.u32 256, 24
        %1043 = vbcast.lane.b32.xlu0 %v1029, %s1042
        %v1044 = vpop.permute.xlu0 %1043
        %v1049 = vadd.f32 %v1014, %v1032
        %v1050 = vadd.f32 %v1017, %v1036
        %v1051 = vadd.f32 %v1020, %v1040
        %v1052 = vadd.f32 %v1023, %v1044
        %v1053 = vxor.u32 %v1049, 2147483648
        %v1054 = vxor.u32 %v1050, 2147483648
        %v1055 = vxor.u32 %v1051, 2147483648
        %v1056 = vxor.u32 %v1052, 2147483648
        %v1057 = vmul.f32 %v1053, 1.442695
        %v1058 = vpow.pop %v1057
        %v1059 = vmul.f32 %v1054, 1.442695
        %v1060 = vpow.pop %v1059
        %v1061 = vmul.f32 %v1055, 1.442695
        %v1062 = vpow.pop %v1061
        %v1063 = vmul.f32 %v1056, 1.442695
        %v1064 = vpow.pop %v1063
        %v1065 = vadd.f32 %v1058, 1.0
        %v1066 = vadd.f32 %v1060, 1.0
        %v1067 = vadd.f32 %v1062, 1.0
        %v1068 = vadd.f32 %v1064, 1.0
        %v1069 = vrcp.pop %v1065
        %v1070 = vmul.f32 1.0, %v1069
        %v1071 = vrcp.pop %v1066
        %v1072 = vmul.f32 1.0, %v1071
        %v1073 = vrcp.pop %v1067
        %v1074 = vmul.f32 1.0, %v1073
        %v1075 = vrcp.pop %v1068
        %v1076 = vmul.f32 1.0, %v1075
        %1078 = vset.pattern.permute.xlu0 0
        %1079 = vperm.xlu0 %1078, %v1070
        %v1080 = vpop.permute.xlu0 %1079
        %1083 = vset.pattern.permute.xlu0 0
        %1084 = vperm.xlu0 %1083, %v1072
        %v1085 = vpop.permute.xlu0 %1084
        %1088 = vset.pattern.permute.xlu0 0
        %1089 = vperm.xlu0 %1088, %v1074
        %v1090 = vpop.permute.xlu0 %1089
        %1093 = vset.pattern.permute.xlu0 0
        %1094 = vperm.xlu0 %1093, %v1076
        %v1095 = vpop.permute.xlu0 %1094
        %v1097 = vmul.f32 %v243, %v1080
        %v1098 = vmul.f32 %v244, %v1080
        %v1099 = vmul.f32 %v245, %v1085
        %v1100 = vmul.f32 %v246, %v1085
        %v1101 = vmul.f32 %v247, %v1090
        %v1102 = vmul.f32 %v248, %v1090
        %v1103 = vmul.f32 %v249, %v1095
        %v1104 = vmul.f32 %v250, %v1095
        %1105 = vst [vmem:[%s242] sm:$0xff] %v1097
        %1106 = vst [vmem:[%s242 + $0x8] sm:$0xff] %v1098
        %1107 = vst [vmem:[%s242 + $0x10] sm:$0xff] %v1099
        %1108 = vst [vmem:[%s242 + $0x18] sm:$0xff] %v1100
        %1109 = vst [vmem:[%s242 + $0x20] sm:$0xff] %v1101
        %1110 = vst [vmem:[%s242 + $0x28] sm:$0xff] %v1102
        %1111 = vst [vmem:[%s242 + $0x30] sm:$0xff] %v1103
        %1112 = vst [vmem:[%s242 + $0x38] sm:$0xff] %v1104
        %s1113 = sand.u32 %s140, 1
        %s1114 = scalar_lea.sflag [#allocation4], %s1113
        %s1115 = sand.u32 %s140, 1
        %s1116 = smul.addr %s1115, 64
        %s1117 = scalar_lea.vmem [#allocation5], %s1116
        // Predicated region
        $region45: #{tpu_custom_call.1} parent=39 // pred_check
          %p1118 = pneg %p150
        $region46: #{tpu_custom_call.1} parent=39 // pred_check_branch
          %1120 = sbr.rel (%p1118) target = $region48
        $region47: #{tpu_custom_call.1} parent=39 // pred_region
          %s1122 = ssub.s32 1024, 1024
          %1123 = vsyncadd %s1114, %s1122
          %s1124 = smul.addr %s22, 8
          %s1125 = smul.addr %s1124, 128
          %s1126 = scalar_lea.hbm %s5, %s1125
          %s1127 = sshll.u32 %s1117, 4
          %s1128 = int_to_ptr.vmem [resolvable:$true] %s1127
          %1133 = dma.vmem_to_hbm [thread:$0]  %s1128, 1024, %s1126, %s1114, 256, 256, 16
        $region48: #{tpu_custom_call.1} parent=39 // pred_fallthru
          _
      $region40: #{tpu_custom_call.1} parent=5 // pred_fallthru
        _
      %p1134 = scmp.le.s32.totalorder 2, %s17
      // Predicated region
      $region49: #{tpu_custom_call.1} parent=5 // pred_check
        %p1135 = pneg %p1134
      $region50: #{tpu_custom_call.1} parent=5 // pred_check_branch
        %1137 = sbr.rel (%p1135) target = $region52
      $region51: #{tpu_custom_call.1} parent=5 // pred_region
        %s1138 = ssub.s32 %s17, 2
        // Predicated region
        $region53: #{tpu_custom_call.1} parent=51 // pred_check
          %p1139 = pneg %p156
        $region54: #{tpu_custom_call.1} parent=51 // pred_check_branch
          %1141 = sbr.rel (%p1139) target = $region56
        $region55: #{tpu_custom_call.1} parent=51 // pred_region
          %s1142 = sand.u32 %s141, 1
          %s1143 = scalar_lea.sflag [#allocation4], %s1142
          %s1144 = sand.u32 %s141, 1
          %s1145 = smul.addr %s1144, 64
          %s1146 = scalar_lea.vmem [#allocation5], %s1145
          %1147 = dma.done %s1143, 1024
        $region56: #{tpu_custom_call.1} parent=51 // pred_fallthru
          _
      $region52: #{tpu_custom_call.1} parent=5 // pred_fallthru
        _
    $region6: #{tpu_custom_call.1} parent=1 // loop_footer
      %s21 = sadd.s32 1, %s17
    $region7: #{tpu_custom_call.1} parent=1 // loop_footer_branch
      %16 = sbr.rel target = $region3
    $region8: #{tpu_custom_call.1} parent=1 // loop_exit
      _
    %1148 = vsyncpa [#allocation3], 1
    %s1149 = scalar_lea.sflag [#allocation3], 1
    %1150 = vsyncpa %s1149, 1
    %1151 = vsyncpa [#allocation4], 1
    %s1152 = scalar_lea.sflag [#allocation4], 1
    %1153 = vsyncpa %s1152, 1

</llo_original>
